<compile_context>
chip_gen: v6e
topology: v6e:2x2x1
jax: 0.10.0
libtpu: 0.0.40
codegen_flags: <defaults>
</compile_context>

<pallas_src>
import functools

import jax
import jax.numpy as jnp
import numpy as np
from jax import lax
from jax.experimental import pallas as pl
from jax.experimental.pallas import tpu as pltpu


# ----------------------------------------------------------------------------
# Kernel 1: char encoder for a block of words
#   fused bigram+trigram conv (+bias+PE), AttentionWithContext, fused linear1
# ----------------------------------------------------------------------------
def word_encoder_kernel(xp_ref, wc_ref, bpe_ref, wa_ref, ba_ref, ua_ref,
                        w1_ref, out_ref):
    N, Wp2, D = xp_ref.shape                 # N = words_in_block * batch
    W = Wp2 - 2
    D2 = 2 * D
    M = N * W

    # Fused conv: 3 taps, bigram|trigram outputs stacked along lanes.
    acc = jnp.zeros((M, D2), jnp.float32)
    for j in range(3):
        xj = xp_ref[:, j:j + W, :].reshape(M, D)          # shifted window
        acc = acc + jnp.dot(xj, wc_ref[j], preferred_element_type=jnp.float32)
    cat = acc.reshape(N, W, D2) + bpe_ref[...]            # + [bias|bias]+[PE|PE]

    # AttentionWithContext over the character axis W.
    catf = cat.reshape(M, D2).astype(jnp.bfloat16)
    uit = jnp.tanh(
        jnp.dot(catf, wa_ref[...], preferred_element_type=jnp.float32)
        + ba_ref[...]).reshape(N, W, D2)
    scores = jnp.sum(uit * ua_ref[...], axis=-1)          # (N, W)
    m = jnp.max(scores, axis=-1, keepdims=True)
    e = jnp.exp(scores - m)
    a = e * pl.reciprocal(jnp.sum(e, axis=-1, keepdims=True), approx=True)
    wemb = jnp.sum(cat * a[:, :, None], axis=1)           # (N, 2D)

    # fused linear1 (2D -> D, no bias)
    out_ref[...] = jnp.dot(wemb.astype(jnp.bfloat16), w1_ref[...],
                           preferred_element_type=jnp.float32
                           ).astype(out_ref.dtype)


def word_encoder(xp, w_conv, bpe, wa, ba, ua, w1, *, rows_per_block=None):
    SB, Wp2, D = xp.shape
    n = SB if rows_per_block is None else rows_per_block
    assert SB % n == 0

    def fullspec(a):
        return pl.BlockSpec(a.shape, lambda s: (0,) * a.ndim)

    return pl.pallas_call(
        word_encoder_kernel,
        out_shape=jax.ShapeDtypeStruct((SB, D), jnp.bfloat16),
        grid=(SB // n,),
        in_specs=[
            pl.BlockSpec((n, Wp2, D), lambda s: (s, 0, 0)),
            fullspec(w_conv), fullspec(bpe), fullspec(wa),
            fullspec(ba), fullspec(ua), fullspec(w1),
        ],
        out_specs=pl.BlockSpec((n, D), lambda s: (s, 0)),
        compiler_params=pltpu.CompilerParams(
            dimension_semantics=("parallel",)),
    )(xp, w_conv, bpe, wa, ba, ua, w1)


# ----------------------------------------------------------------------------
# Kernel 2: fused bidirectional LSTM layer (time-major-flat), PyTorch gate order
#   mode="mid"  -> writes the (S*B, 2H) layer output
#   mode="head" -> fuses mean-over-time + padded output projection
# ----------------------------------------------------------------------------
def bilstm_kernel(x_ref, wih_ref, whh_ref, b_ref, *rest, S, B, H, mode):
    H2, H8 = 2 * H, 8 * H
    if mode == "head":
        wo_ref, out_ref, g_scr, h_scr, c_scr, acc_scr = rest
    else:
        y_ref, g_scr, hbuf, h_scr, c_scr = rest

    # Hoisted input projection: one MXU matmul covers every timestep and both
    # directions (wih columns gate-interleaved [i_f i_b f_f f_b g_f g_b o_f o_b]).
    g_scr[...] = (jnp.dot(x_ref[...], wih_ref[...],
                          preferred_element_type=jnp.float32) + b_ref[...])
    h_scr[...] = jnp.zeros_like(h_scr)
    c_scr[...] = jnp.zeros_like(c_scr)
    if mode == "head":
        acc_scr[...] = jnp.zeros_like(acc_scr)

    # Lane masks (hoisted): inside each 2H gate block, low H lanes = forward
    # direction, high H lanes = backward direction.
    fwd8 = (lax.broadcasted_iota(jnp.int32, (1, H8), 1) // H) % 2 == 0

    @pl.loop(0, S)
    def _(t):
        # fwd consumes time t, bwd consumes time S-1-t; merge with a lane select.
        gx = jnp.where(fwd8,
                       g_scr[pl.ds(t * B, B), :],
                       g_scr[pl.ds((S - 1 - t) * B, B), :])
        # single block-diagonal recurrent matmul for both directions
        gt = gx + jnp.dot(h_scr[...].astype(jnp.bfloat16), whh_ref[...],
                          preferred_element_type=jnp.float32)
        i_g = jax.nn.sigmoid(gt[:, 0 * H2:1 * H2])        # 128-lane aligned slices
        f_g = jax.nn.sigmoid(gt[:, 1 * H2:2 * H2])
        g_g = jnp.tanh(gt[:, 2 * H2:3 * H2])
        o_g = jax.nn.sigmoid(gt[:, 3 * H2:4 * H2])
        c = f_g * c_scr[...] + i_g * g_g
        h = o_g * jnp.tanh(c)                             # (B, 2H) = [h_f | h_b]
        c_scr[...] = c
        h_scr[...] = h
        if mode == "head":
            acc_scr[...] = acc_scr[...] + h               # order-free time sum
        else:
            hbuf[pl.ds(t * B, B), :] = h                  # lane-dense VMEM store

    if mode == "head":
        # Fused head: mean over time + 128-padded output projection.
        mean_h = acc_scr[...] * (1.0 / S)
        out_ref[...] = jnp.dot(mean_h.astype(jnp.bfloat16), wo_ref[...],
                               preferred_element_type=jnp.float32)
    else:
        # Un-reverse the backward stream: y[t] = [h_fwd(t) | h_bwd(t)].
        fwd2 = (lax.broadcasted_iota(jnp.int32, (1, H2), 1) // H) % 2 == 0

        @pl.loop(0, S)
        def _(t):
            y_ref[pl.ds(t * B, B), :] = jnp.where(
                fwd2,
                hbuf[pl.ds(t * B, B), :],
                hbuf[pl.ds((S - 1 - t) * B, B), :]).astype(y_ref.dtype)


def _bilstm_call(x, wih, whh, b, *, S, B, H, wo_pad=None):
    H2, H8 = 2 * H, 8 * H
    if wo_pad is None:
        return pl.pallas_call(
            functools.partial(bilstm_kernel, S=S, B=B, H=H, mode="mid"),
            out_shape=jax.ShapeDtypeStruct((S * B, H2), jnp.bfloat16),
            scratch_shapes=[pltpu.VMEM((S * B, H8), jnp.float32),  # hoisted gates_x
                            pltpu.VMEM((S * B, H2), jnp.float32),  # h history
                            pltpu.VMEM((B, H2), jnp.float32),      # h state
                            pltpu.VMEM((B, H2), jnp.float32)],     # c state
        )(x, wih, whh, b)
    n_pad = wo_pad.shape[1]
    return pl.pallas_call(
        functools.partial(bilstm_kernel, S=S, B=B, H=H, mode="head"),
        out_shape=jax.ShapeDtypeStruct((B, n_pad), jnp.float32),
        scratch_shapes=[pltpu.VMEM((S * B, H8), jnp.float32),
                        pltpu.VMEM((B, H2), jnp.float32),
                        pltpu.VMEM((B, H2), jnp.float32),
                        pltpu.VMEM((B, H2), jnp.float32)],         # time-sum acc
    )(x, wih, whh, b, wo_pad)


# ----------------------------------------------------------------------------
# Host-side weight preparation (layout plumbing only)
# ----------------------------------------------------------------------------
def _prep_bilstm_weights(layer, H):
    """Interleave fwd/bwd gate columns and build the block-diagonal W_hh."""
    def inter(wf, wb_):
        K = wf.shape[0]
        return jnp.stack([wf.reshape(K, 4, H), wb_.reshape(K, 4, H)],
                         axis=2).reshape(K, 8 * H)

    wih = inter(layer["wih_f"], layer["wih_b"]).astype(jnp.bfloat16)  # (in, 8H)
    zh = jnp.zeros((H, 4 * H), jnp.float32)
    whh = jnp.concatenate([inter(layer["whh_f"], zh),                 # rows for h_f
                           inter(zh, layer["whh_b"])],                # rows for h_b
                          axis=0).astype(jnp.bfloat16)                # (2H, 8H)
    b = inter(layer["b_f"], layer["b_b"])                             # (1, 8H) f32
    return wih, whh, b


# ----------------------------------------------------------------------------
# Glue: embeddings, fused conv weights, bi-LSTM stack (time-major-flat)
# ----------------------------------------------------------------------------
def cs_elmo_forward(params, src, word_src):
    # src: (B, S, W) int32 char ids; word_src: (B, S) int32 word ids
    B, S, W = src.shape
    D = params["char_table"].shape[1]
    H = 2 * D
    bf16 = jnp.bfloat16

    # char embeddings, time-major-flat rows (s*B + b), right zero-pad W by 2
    ce = jnp.take(params["char_table"], src, axis=0)                  # (B,S,W,D)
    ce = jnp.transpose(ce, (1, 0, 2, 3)).reshape(S * B, W, D)
    xp = jnp.pad(ce, ((0, 0), (0, 2), (0, 0))).astype(bf16)

    # fuse bigram/trigram conv weights along N; fold bias + PE into one table
    wb, wt = params["wb"], params["wt"]
    w_conv = jnp.stack(
        [jnp.concatenate([wb[0], wt[0]], axis=1),
         jnp.concatenate([wb[1], wt[1]], axis=1),
         jnp.concatenate([jnp.zeros_like(wt[2]), wt[2]], axis=1)],
        axis=0).astype(bf16)                                          # (3, D, 2D)
    bpe = jnp.concatenate([params["bb"] + params["pe_b"],
                           params["bt"] + params["pe_t"]], axis=-1)   # (W, 2D)

    proj = word_encoder(xp, w_conv, bpe,
                        params["wa"].astype(bf16), params["ba"], params["ua"],
                        params["w1"].astype(bf16))                    # (S*B, D)

    wemb = jnp.take(params["word_table"],
                    jnp.transpose(word_src).reshape(-1),
                    axis=0).astype(bf16)                              # (S*B, D)
    x = jnp.concatenate([proj, wemb], axis=-1)                        # (S*B, 2D)

    n_out = params["wo"].shape[1]
    n_pad = ((n_out + 127) // 128) * 128
    wo_pad = jnp.zeros((2 * H, n_pad), bf16).at[:, :n_out].set(
        params["wo"].astype(bf16))

    n_layers = len(params["lstm"])
    out = None
    for li, layer in enumerate(params["lstm"]):
        wih, whh, b = _prep_bilstm_weights(layer, H)
        if li < n_layers - 1:
            x = _bilstm_call(x, wih, whh, b, S=S, B=B, H=H)           # (S*B, 2H)
        else:
            out = _bilstm_call(x, wih, whh, b, S=S, B=B, H=H,
                               wo_pad=wo_pad)                         # (B, n_pad)
    return out[:, :n_out]


# ----------------------------------------------------------------------------
# Deterministic parameter init
# ----------------------------------------------------------------------------
def sinusoidal_pe(max_len, d_model):
    pos = np.arange(max_len)[:, None].astype(np.float64)
    i = np.arange(d_model)[None, :]
    angle = pos / np.power(10000.0, (2 * (i // 2)) / d_model)
    pe = np.where(i % 2 == 0, np.sin(angle), np.cos(angle))
    return jnp.asarray(pe, dtype=jnp.float32)


def init_params(key, char_vocab, word_vocab, D, max_len, N, n_out, W):
    keys = iter(jax.random.split(key, 64))
    nrm = lambda shape: (0.1 * jax.random.normal(next(keys), shape)
                         ).astype(jnp.float32)
    H = 2 * D
    pe = sinusoidal_pe(max_len, D)[:W]
    params = dict(
        char_table=nrm((char_vocab, D)),
        word_table=nrm((word_vocab, D)),
        wb=nrm((2, D, D)), bb=nrm((1, D)),           # Conv1d k=2 (taps, in, out)
        wt=nrm((3, D, D)), bt=nrm((1, D)),           # Conv1d k=3
        pe_b=pe, pe_t=pe,
        wa=nrm((H, H)), ba=nrm((1, H)), ua=nrm((1, H)),
        w1=nrm((H, D)),                              # linear1 (no bias)
        wo=nrm((2 * H, n_out)),                      # out (no bias)
        lstm=[],
    )
    for l in range(N):
        in_dim = H if l == 0 else 2 * H
        params["lstm"].append(dict(
            wih_f=nrm((in_dim, 4 * H)), whh_f=nrm((H, 4 * H)), b_f=nrm((1, 4 * H)),
            wih_b=nrm((in_dim, 4 * H)), whh_b=nrm((H, 4 * H)), b_b=nrm((1, 4 * H)),
        ))
    return params


# ----------------------------------------------------------------------------
# Pure-JAX reference (same math, f32) for a correctness check
# ----------------------------------------------------------------------------
def reference_forward(params, src, word_src):
    hp = lax.Precision.HIGHEST
    B, S, W = src.shape
    D = params["char_table"].shape[1]
    H = 2 * D
    ce = jnp.take(params["char_table"], src, axis=0)
    xp = jnp.pad(ce, ((0, 0), (0, 0), (0, 2), (0, 0)))

    def conv(w, b, k):
        return sum(jnp.einsum("bswd,de->bswe", xp[:, :, j:j + W, :], w[j],
                              precision=hp) for j in range(k)) + b

    bi = conv(params["wb"], params["bb"], 2) + params["pe_b"]
    tri = conv(params["wt"], params["bt"], 3) + params["pe_t"]
    cat = jnp.concatenate([bi, tri], axis=-1)
    uit = jnp.tanh(jnp.einsum("bswd,de->bswe", cat, params["wa"],
                              precision=hp) + params["ba"])
    scores = jnp.sum(uit * params["ua"], axis=-1)
    a = jax.nn.softmax(scores, axis=-1)
    we = jnp.sum(cat * a[..., None], axis=2)
    proj = jnp.einsum("bsd,de->bse", we, params["w1"], precision=hp)
    wemb = jnp.take(params["word_table"], word_src, axis=0)
    x = jnp.concatenate([proj, wemb], axis=-1)

    def lstm_dir(xs, wih, whh, b):
        def step(carry, xt):
            h, c = carry
            g = (jnp.einsum("bi,ij->bj", xt, wih, precision=hp)
                 + jnp.einsum("bh,hj->bj", h, whh, precision=hp) + b[0])
            i = jax.nn.sigmoid(g[:, :H]); f = jax.nn.sigmoid(g[:, H:2 * H])
            gg = jnp.tanh(g[:, 2 * H:3 * H]); o = jax.nn.sigmoid(g[:, 3 * H:])
            c = f * c + i * gg
            h = o * jnp.tanh(c)
            return (h, c), h
        h0 = jnp.zeros((xs.shape[1], H), jnp.float32)
        c0 = jnp.zeros((xs.shape[1], H), jnp.float32)
        _, ys = lax.scan(step, (h0, c0), xs)
        return ys

    for layer in params["lstm"]:
        xs = jnp.transpose(x, (1, 0, 2))
        yf = lstm_dir(xs, layer["wih_f"], layer["whh_f"], layer["b_f"])
        yb = lstm_dir(xs[::-1], layer["wih_b"], layer["whh_b"],
                      layer["b_b"])[::-1]
        x = jnp.transpose(jnp.concatenate([yf, yb], axis=-1), (1, 0, 2))
    m = jnp.mean(x, axis=1)
    return jnp.einsum("bd,do->bo", m, params["wo"], precision=hp)


if __name__ == "__main__":
    char_vocab, word_vocab = 50, 40
    D, max_len, N, n_out = 32, 16, 2, 6
    B, S, W = 2, 4, 8

    key = jax.random.PRNGKey(0)
    kp, ks, kw = jax.random.split(key, 3)
    params = init_params(kp, char_vocab, word_vocab, D, max_len, N, n_out, W)
    src = jax.random.randint(ks, (B, S, W), 0, char_vocab, dtype=jnp.int32)
    word_src = jax.random.randint(kw, (B, S), 0, word_vocab, dtype=jnp.int32)

    out = jax.block_until_ready(cs_elmo_forward(params, src, word_src))
    ref = jax.block_until_ready(reference_forward(params, src, word_src))

    # bf16 matmul operands (f32 accumulation) => loosened tolerance vs f32 ref.
    np.testing.assert_allclose(np.asarray(out), np.asarray(ref),
                               atol=2e-2, rtol=2e-2)
    assert out.shape == (B, n_out)
    print("KERNEL_OK")
</pallas_src>

<mosaic_0001>
module attributes {stable_mosaic.version = 11 : i64} {
  func.func @word_encoder_kernel(%arg0: i32, %arg1: memref<8x10x32xbf16, #tpu.memory_space<vmem>>, %arg2: memref<3x32x64xbf16, #tpu.memory_space<vmem>>, %arg3: memref<8x64xf32, #tpu.memory_space<vmem>>, %arg4: memref<64x64xbf16, #tpu.memory_space<vmem>>, %arg5: memref<1x64xf32, #tpu.memory_space<vmem>>, %arg6: memref<1x64xf32, #tpu.memory_space<vmem>>, %arg7: memref<64x32xbf16, #tpu.memory_space<vmem>>, %arg8: memref<8x32xbf16, #tpu.memory_space<vmem>>) attributes {dimension_semantics = [#tpu.dimension_semantics<parallel>], iteration_bounds = array<i64: 1>, scalar_prefetch = 0 : i64, scratch_operands = 0 : i64, tpu.core_type = #tpu.core_type<tc>, window_params = [{transform_indices = @transform_0, window_bounds = array<i64: 8, 10, 32>}, {pipeline_mode = #tpu.pipeline_mode<synchronous>, transform_indices = @transform_1, window_bounds = array<i64: 3, 32, 64>}, {pipeline_mode = #tpu.pipeline_mode<synchronous>, transform_indices = @transform_2, window_bounds = array<i64: 8, 64>}, {pipeline_mode = #tpu.pipeline_mode<synchronous>, transform_indices = @transform_3, window_bounds = array<i64: 64, 64>}, {pipeline_mode = #tpu.pipeline_mode<synchronous>, transform_indices = @transform_4, window_bounds = array<i64: 1, 64>}, {pipeline_mode = #tpu.pipeline_mode<synchronous>, transform_indices = @transform_5, window_bounds = array<i64: 1, 64>}, {pipeline_mode = #tpu.pipeline_mode<synchronous>, transform_indices = @transform_6, window_bounds = array<i64: 64, 32>}, {transform_indices = @transform_7, window_bounds = array<i64: 8, 32>}]} {
    %cst = arith.constant 0.000000e+00 : f32
    %0 = vector.broadcast %cst : f32 to vector<64x64xf32>
    %c0 = arith.constant 0 : index
    %c0_0 = arith.constant 0 : index
    %c0_1 = arith.constant 0 : index
    %1 = vector.load %arg1[%c0, %c0_0, %c0_1] : memref<8x10x32xbf16, #tpu.memory_space<vmem>>, vector<8x8x32xbf16>
    %2 = vector.shape_cast %1 : vector<8x8x32xbf16> to vector<64x32xbf16>
    %c0_2 = arith.constant 0 : index
    %c0_3 = arith.constant 0 : index
    %c0_4 = arith.constant 0 : index
    %3 = vector.load %arg2[%c0_2, %c0_3, %c0_4] : memref<3x32x64xbf16, #tpu.memory_space<vmem>>, vector<1x32x64xbf16>
    %4 = vector.shape_cast %3 : vector<1x32x64xbf16> to vector<32x64xbf16>
    %cst_5 = arith.constant dense<0.000000e+00> : vector<64x64xf32>
    %5 = tpu.matmul %2, %4, %cst_5 {dimension_numbers = #tpu.dot_dimension_numbers<[1], [0], [0], [1], [0, 0, 1, 1], [], []>} : vector<64x32xbf16>, vector<32x64xbf16>, vector<64x64xf32> -> vector<64x64xf32>
    %6 = arith.addf %0, %5 : vector<64x64xf32>
    %c0_6 = arith.constant 0 : index
    %c1 = arith.constant 1 : index
    %c0_7 = arith.constant 0 : index
    %7 = vector.load %arg1[%c0_6, %c1, %c0_7] : memref<8x10x32xbf16, #tpu.memory_space<vmem>>, vector<8x8x32xbf16>
    %8 = vector.shape_cast %7 : vector<8x8x32xbf16> to vector<64x32xbf16>
    %c1_8 = arith.constant 1 : index
    %c0_9 = arith.constant 0 : index
    %c0_10 = arith.constant 0 : index
    %9 = vector.load %arg2[%c1_8, %c0_9, %c0_10] : memref<3x32x64xbf16, #tpu.memory_space<vmem>>, vector<1x32x64xbf16>
    %10 = vector.shape_cast %9 : vector<1x32x64xbf16> to vector<32x64xbf16>
    %cst_11 = arith.constant dense<0.000000e+00> : vector<64x64xf32>
    %11 = tpu.matmul %8, %10, %cst_11 {dimension_numbers = #tpu.dot_dimension_numbers<[1], [0], [0], [1], [0, 0, 1, 1], [], []>} : vector<64x32xbf16>, vector<32x64xbf16>, vector<64x64xf32> -> vector<64x64xf32>
    %12 = arith.addf %6, %11 : vector<64x64xf32>
    %c0_12 = arith.constant 0 : index
    %c2 = arith.constant 2 : index
    %c0_13 = arith.constant 0 : index
    %13 = vector.load %arg1[%c0_12, %c2, %c0_13] : memref<8x10x32xbf16, #tpu.memory_space<vmem>>, vector<8x8x32xbf16>
    %14 = vector.shape_cast %13 : vector<8x8x32xbf16> to vector<64x32xbf16>
    %c2_14 = arith.constant 2 : index
    %c0_15 = arith.constant 0 : index
    %c0_16 = arith.constant 0 : index
    %15 = vector.load %arg2[%c2_14, %c0_15, %c0_16] : memref<3x32x64xbf16, #tpu.memory_space<vmem>>, vector<1x32x64xbf16>
    %16 = vector.shape_cast %15 : vector<1x32x64xbf16> to vector<32x64xbf16>
    %cst_17 = arith.constant dense<0.000000e+00> : vector<64x64xf32>
    %17 = tpu.matmul %14, %16, %cst_17 {dimension_numbers = #tpu.dot_dimension_numbers<[1], [0], [0], [1], [0, 0, 1, 1], [], []>} : vector<64x32xbf16>, vector<32x64xbf16>, vector<64x64xf32> -> vector<64x64xf32>
    %18 = arith.addf %12, %17 : vector<64x64xf32>
    %19 = vector.shape_cast %18 : vector<64x64xf32> to vector<8x8x64xf32>
    %c0_18 = arith.constant 0 : index
    %c0_19 = arith.constant 0 : index
    %20 = vector.load %arg3[%c0_18, %c0_19] : memref<8x64xf32, #tpu.memory_space<vmem>>, vector<8x64xf32>
    %21 = vector.shape_cast %20 : vector<8x64xf32> to vector<1x8x64xf32>
    %22 = vector.broadcast %21 : vector<1x8x64xf32> to vector<8x8x64xf32>
    %23 = arith.addf %19, %22 : vector<8x8x64xf32>
    %24 = vector.shape_cast %23 : vector<8x8x64xf32> to vector<64x64xf32>
    %25 = arith.truncf %24 : vector<64x64xf32> to vector<64x64xbf16>
    %c0_20 = arith.constant 0 : index
    %c0_21 = arith.constant 0 : index
    %26 = vector.load %arg4[%c0_20, %c0_21] : memref<64x64xbf16, #tpu.memory_space<vmem>>, vector<64x64xbf16>
    %cst_22 = arith.constant dense<0.000000e+00> : vector<64x64xf32>
    %27 = tpu.matmul %25, %26, %cst_22 {dimension_numbers = #tpu.dot_dimension_numbers<[1], [0], [0], [1], [0, 0, 1, 1], [], []>} : vector<64x64xbf16>, vector<64x64xbf16>, vector<64x64xf32> -> vector<64x64xf32>
    %c0_23 = arith.constant 0 : index
    %c0_24 = arith.constant 0 : index
    %28 = vector.load %arg5[%c0_23, %c0_24] : memref<1x64xf32, #tpu.memory_space<vmem>>, vector<1x64xf32>
    %29 = vector.broadcast %28 : vector<1x64xf32> to vector<64x64xf32>
    %30 = arith.addf %27, %29 : vector<64x64xf32>
    %31 = math.tanh %30 : vector<64x64xf32>
    %32 = vector.shape_cast %31 : vector<64x64xf32> to vector<8x8x64xf32>
    %c0_25 = arith.constant 0 : index
    %c0_26 = arith.constant 0 : index
    %33 = vector.load %arg6[%c0_25, %c0_26] : memref<1x64xf32, #tpu.memory_space<vmem>>, vector<1x64xf32>
    %34 = vector.shape_cast %33 : vector<1x64xf32> to vector<1x1x64xf32>
    %35 = vector.broadcast %34 : vector<1x1x64xf32> to vector<8x8x64xf32>
    %36 = arith.mulf %32, %35 : vector<8x8x64xf32>
    %cst_27 = arith.constant dense<0.000000e+00> : vector<8x8xf32>
    %37 = vector.multi_reduction <add>, %36, %cst_27 [2] : vector<8x8x64xf32> to vector<8x8xf32>
    %cst_28 = arith.constant dense<0xFF800000> : vector<8xf32>
    %38 = vector.multi_reduction <maximumf>, %37, %cst_28 [1] : vector<8x8xf32> to vector<8xf32>
    %39 = vector.shape_cast %38 : vector<8xf32> to vector<8x1xf32>
    %40 = vector.broadcast %39 : vector<8x1xf32> to vector<8x8xf32>
    %41 = arith.subf %37, %40 : vector<8x8xf32>
    %42 = math.exp %41 : vector<8x8xf32>
    %cst_29 = arith.constant dense<0.000000e+00> : vector<8xf32>
    %43 = vector.multi_reduction <add>, %42, %cst_29 [1] : vector<8x8xf32> to vector<8xf32>
    %44 = vector.shape_cast %43 : vector<8xf32> to vector<8x1xf32>
    %45 = tpu.reciprocal %44 {approx = true} : vector<8x1xf32> -> vector<8x1xf32>
    %46 = vector.broadcast %45 : vector<8x1xf32> to vector<8x8xf32>
    %47 = arith.mulf %42, %46 : vector<8x8xf32>
    %48 = vector.shape_cast %47 : vector<8x8xf32> to vector<8x8x1xf32>
    %49 = vector.broadcast %48 : vector<8x8x1xf32> to vector<8x8x64xf32>
    %50 = arith.mulf %23, %49 : vector<8x8x64xf32>
    %cst_30 = arith.constant dense<0.000000e+00> : vector<8x64xf32>
    %51 = vector.multi_reduction <add>, %50, %cst_30 [1] : vector<8x8x64xf32> to vector<8x64xf32>
    %52 = arith.truncf %51 : vector<8x64xf32> to vector<8x64xbf16>
    %c0_31 = arith.constant 0 : index
    %c0_32 = arith.constant 0 : index
    %53 = vector.load %arg7[%c0_31, %c0_32] : memref<64x32xbf16, #tpu.memory_space<vmem>>, vector<64x32xbf16>
    %cst_33 = arith.constant dense<0.000000e+00> : vector<8x32xf32>
    %54 = tpu.matmul %52, %53, %cst_33 {dimension_numbers = #tpu.dot_dimension_numbers<[1], [0], [0], [1], [0, 0, 1, 1], [], []>} : vector<8x64xbf16>, vector<64x32xbf16>, vector<8x32xf32> -> vector<8x32xf32>
    %55 = arith.truncf %54 : vector<8x32xf32> to vector<8x32xbf16>
    %c0_34 = arith.constant 0 : index
    %c0_35 = arith.constant 0 : index
    %56 = vector.load %arg8[%c0_34, %c0_35] : memref<8x32xbf16, #tpu.memory_space<vmem>>, vector<8x32xbf16>
    tpu.vector_store %arg8[%c0_34, %c0_35], %55 {strides = array<i32>} : memref<8x32xbf16, #tpu.memory_space<vmem>>, vector<8x32xbf16>,
    return
  }
  func.func @transform_0(%arg0: i32) -> (i32, i32, i32) {
    %c0_i32 = arith.constant 0 : i32
    %c0_i32_0 = arith.constant 0 : i32
    %c0_i32_1 = arith.constant 0 : i32
    return %arg0, %c0_i32, %c0_i32_0 : i32, i32, i32
  }
  func.func @transform_1(%arg0: i32) -> (i32, i32, i32) {
    %c0_i32 = arith.constant 0 : i32
    %c0_i32_0 = arith.constant 0 : i32
    %c0_i32_1 = arith.constant 0 : i32
    %c0_i32_2 = arith.constant 0 : i32
    return %c0_i32, %c0_i32_0, %c0_i32_1 : i32, i32, i32
  }
  func.func @transform_2(%arg0: i32) -> (i32, i32) {
    %c0_i32 = arith.constant 0 : i32
    %c0_i32_0 = arith.constant 0 : i32
    %c0_i32_1 = arith.constant 0 : i32
    return %c0_i32, %c0_i32_0 : i32, i32
  }
  func.func @transform_3(%arg0: i32) -> (i32, i32) {
    %c0_i32 = arith.constant 0 : i32
    %c0_i32_0 = arith.constant 0 : i32
    %c0_i32_1 = arith.constant 0 : i32
    return %c0_i32, %c0_i32_0 : i32, i32
  }
  func.func @transform_4(%arg0: i32) -> (i32, i32) {
    %c0_i32 = arith.constant 0 : i32
    %c0_i32_0 = arith.constant 0 : i32
    %c0_i32_1 = arith.constant 0 : i32
    return %c0_i32, %c0_i32_0 : i32, i32
  }
  func.func @transform_5(%arg0: i32) -> (i32, i32) {
    %c0_i32 = arith.constant 0 : i32
    %c0_i32_0 = arith.constant 0 : i32
    %c0_i32_1 = arith.constant 0 : i32
    return %c0_i32, %c0_i32_0 : i32, i32
  }
  func.func @transform_6(%arg0: i32) -> (i32, i32) {
    %c0_i32 = arith.constant 0 : i32
    %c0_i32_0 = arith.constant 0 : i32
    %c0_i32_1 = arith.constant 0 : i32
    return %c0_i32, %c0_i32_0 : i32, i32
  }
  func.func @transform_7(%arg0: i32) -> (i32, i32) {
    %c0_i32 = arith.constant 0 : i32
    %c0_i32_0 = arith.constant 0 : i32
    return %arg0, %c0_i32 : i32, i32
  }
}

</mosaic_0001>

<llo_original>
// kernel: tpu_custom_call.1
$region0: #{tpu_custom_call.1}
  #allocation0 [shape = 'u32[]', space=smem, size = 0x4, offset = 0x4, fixed_abs, tag = 'smem constant byte address 0x4 - core index']
  #allocation1 [shape = 'u32[144,128]{1,0:T(1,128)}', space=vmem, size = 0x12000, scoped, tag = 'internal scratch']
  %s0 = inlined_call_operand.vmem [shape: bf16[8,10,32], index: 0, kind: input, shape index: {}]
  %s1 = inlined_call_operand.vmem [shape: bf16[3,32,64], index: 1, kind: input, shape index: {}]
  %s2 = inlined_call_operand.vmem [shape: f32[8,64], index: 2, kind: input, shape index: {}]
  %s3 = inlined_call_operand.vmem [shape: bf16[64,64], index: 3, kind: input, shape index: {}]
  %s4 = inlined_call_operand.vmem [shape: f32[1,64], index: 4, kind: input, shape index: {}]
  %s5 = inlined_call_operand.vmem [shape: f32[1,64], index: 5, kind: input, shape index: {}]
  %s6 = inlined_call_operand.vmem [shape: bf16[64,32], index: 6, kind: input, shape index: {}]
  %s7 = inlined_call_operand.hbm [shape: bf16[8,32], index: 7, kind: output, shape index: {}]
  %s8 = sld [smem:[#allocation0]]
  $region38: #{tpu_custom_call.1} parent=0
    _
  %s10 = ssub.s32 1, %s8
  %s11 = scalar_select 0, %s10, %s8
  $region1: #{tpu_custom_call.1} parent=0
    #allocation2 [shape = 'u8[2048]{0}', space=vmem, size = 0x800, scoped, tag = 'output window, operand 0, single buffered']
    #allocation3 [shape = 's32[1]{0}', space=sflag, size = 0x4, scoped, tag = 'scoped memory for tpu_custom_call.1']
    %12 = vsyncpa [#allocation3], 0
    // Predicated region
    $region2: #{tpu_custom_call.1} parent=1 // pred_check
      _
    $region3: #{tpu_custom_call.1} parent=1 // pred_check_branch
      %14 = sbr.rel (0) target = $region5
    $region4: #{tpu_custom_call.1} parent=1 // pred_region
      _
    $region5: #{tpu_custom_call.1} parent=1 // pred_fallthru
      _
    // Predicated region
    $region6: #{tpu_custom_call.1} parent=1 // pred_check
      _
    $region7: #{tpu_custom_call.1} parent=1 // pred_check_branch
      %16 = sbr.rel (0) target = $region9
    $region8: #{tpu_custom_call.1} parent=1 // pred_region
      _
    $region9: #{tpu_custom_call.1} parent=1 // pred_fallthru
      _
    // Predicated region
    $region10: #{tpu_custom_call.1} parent=1 // pred_check
      _
    $region11: #{tpu_custom_call.1} parent=1 // pred_check_branch
      %18 = sbr.rel (0) target = $region13
    $region12: #{tpu_custom_call.1} parent=1 // pred_region
      _
    $region13: #{tpu_custom_call.1} parent=1 // pred_fallthru
      _
    // Predicated region
    $region14: #{tpu_custom_call.1} parent=1 // pred_check
      _
    $region15: #{tpu_custom_call.1} parent=1 // pred_check_branch
      %20 = sbr.rel (0) target = $region17
    $region16: #{tpu_custom_call.1} parent=1 // pred_region
      _
    $region17: #{tpu_custom_call.1} parent=1 // pred_fallthru
      _
    // Predicated region
    $region18: #{tpu_custom_call.1} parent=1 // pred_check
      _
    $region19: #{tpu_custom_call.1} parent=1 // pred_check_branch
      %22 = sbr.rel (0) target = $region21
    $region20: #{tpu_custom_call.1} parent=1 // pred_region
      _
    $region21: #{tpu_custom_call.1} parent=1 // pred_fallthru
      _
    // Predicated region
    $region22: #{tpu_custom_call.1} parent=1 // pred_check
      _
    $region23: #{tpu_custom_call.1} parent=1 // pred_check_branch
      %24 = sbr.rel (0) target = $region25
    $region24: #{tpu_custom_call.1} parent=1 // pred_region
      _
    $region25: #{tpu_custom_call.1} parent=1 // pred_fallthru
      _
    // Predicated region
    $region26: #{tpu_custom_call.1} parent=1 // pred_check
      _
    $region27: #{tpu_custom_call.1} parent=1 // pred_check_branch
      %26 = sbr.rel (0) target = $region29
    $region28: #{tpu_custom_call.1} parent=1 // pred_region
      _
    $region29: #{tpu_custom_call.1} parent=1 // pred_fallthru
      _
    %v28 = vld [vmem:[%s0] sm:$0xf]
    %v29 = vld [vmem:[%s0 + $0x8] sm:$0xf]
    %v30 = vld [vmem:[%s0 + $0x10] sm:$0xf]
    %v31 = vld [vmem:[%s0 + $0x18] sm:$0xf]
    %v32 = vld [vmem:[%s0 + $0x20] sm:$0xf]
    %v33 = vld [vmem:[%s0 + $0x28] sm:$0xf]
    %v34 = vld [vmem:[%s0 + $0x30] sm:$0xf]
    %v35 = vld [vmem:[%s0 + $0x38] sm:$0xf]
    %v36 = vld [vmem:[%s1] sm:$0xf]
    %v37 = vld [vmem:[%s1 + $0x4] sm:$0xf]
    %v38 = vld [vmem:[%s1 + $0x8] sm:$0xf]
    %v39 = vld [vmem:[%s1 + $0xc] sm:$0xf]
    %v40 = vld [vmem:[%s0 + $0x4] sm:$0x1]
    %v41 = vld [vmem:[%s0 + $0xc] sm:$0x1]
    %v42 = vld [vmem:[%s0 + $0x14] sm:$0x1]
    %v43 = vld [vmem:[%s0 + $0x1c] sm:$0x1]
    %v44 = vld [vmem:[%s0 + $0x24] sm:$0x1]
    %v45 = vld [vmem:[%s0 + $0x2c] sm:$0x1]
    %v46 = vld [vmem:[%s0 + $0x34] sm:$0x1]
    %v47 = vld [vmem:[%s0 + $0x3c] sm:$0x1]
    %vm48 = vsmask.f32 3328
    %vm49 = vsmask.f32 7440
    %vm50 = vmor %vm48, %vm49
    %v52 = vshrl.u32 %v28, 16
    %v54 = vrot.slane %v52, 4
    %v55 = vshll.u32 %v28, 16
    %v57 = vrot.slane %v55, 5
    %v58 = vor.u32 %v54, %v57
    %v59 = vrot.slane %v58, 4
    %v61 = vshll.u32 %v40, 16
    %v63 = vrot.slane %v61, 5
    %v64 = vsel %vm50, %v59, %v63
    %v66 = vshrl.u32 %v29, 16
    %v68 = vrot.slane %v66, 4
    %v69 = vshll.u32 %v29, 16
    %v71 = vrot.slane %v69, 5
    %v72 = vor.u32 %v68, %v71
    %v73 = vrot.slane %v72, 4
    %v75 = vshll.u32 %v41, 16
    %v77 = vrot.slane %v75, 5
    %v78 = vsel %vm50, %v73, %v77
    %v80 = vshrl.u32 %v30, 16
    %v82 = vrot.slane %v80, 4
    %v83 = vshll.u32 %v30, 16
    %v85 = vrot.slane %v83, 5
    %v86 = vor.u32 %v82, %v85
    %v87 = vrot.slane %v86, 4
    %v89 = vshll.u32 %v42, 16
    %v91 = vrot.slane %v89, 5
    %v92 = vsel %vm50, %v87, %v91
    %v94 = vshrl.u32 %v31, 16
    %v96 = vrot.slane %v94, 4
    %v97 = vshll.u32 %v31, 16
    %v99 = vrot.slane %v97, 5
    %v100 = vor.u32 %v96, %v99
    %v101 = vrot.slane %v100, 4
    %v103 = vshll.u32 %v43, 16
    %v105 = vrot.slane %v103, 5
    %v106 = vsel %vm50, %v101, %v105
    %v108 = vshrl.u32 %v32, 16
    %v110 = vrot.slane %v108, 4
    %v111 = vshll.u32 %v32, 16
    %v113 = vrot.slane %v111, 5
    %v114 = vor.u32 %v110, %v113
    %v115 = vrot.slane %v114, 4
    %v117 = vshll.u32 %v44, 16
    %v119 = vrot.slane %v117, 5
    %v120 = vsel %vm50, %v115, %v119
    %v122 = vshrl.u32 %v33, 16
    %v124 = vrot.slane %v122, 4
    %v125 = vshll.u32 %v33, 16
    %v127 = vrot.slane %v125, 5
    %v128 = vor.u32 %v124, %v127
    %v129 = vrot.slane %v128, 4
    %v131 = vshll.u32 %v45, 16
    %v133 = vrot.slane %v131, 5
    %v134 = vsel %vm50, %v129, %v133
    %v136 = vshrl.u32 %v34, 16
    %v138 = vrot.slane %v136, 4
    %v139 = vshll.u32 %v34, 16
    %v141 = vrot.slane %v139, 5
    %v142 = vor.u32 %v138, %v141
    %v143 = vrot.slane %v142, 4
    %v145 = vshll.u32 %v46, 16
    %v147 = vrot.slane %v145, 5
    %v148 = vsel %vm50, %v143, %v147
    %v150 = vshrl.u32 %v35, 16
    %v152 = vrot.slane %v150, 4
    %v153 = vshll.u32 %v35, 16
    %v155 = vrot.slane %v153, 5
    %v156 = vor.u32 %v152, %v155
    %v157 = vrot.slane %v156, 4
    %v159 = vshll.u32 %v47, 16
    %v161 = vrot.slane %v159, 5
    %v162 = vsel %vm50, %v157, %v161
    %s163 = scalar_lea.vmem %s1, 16
    %v164 = vld [vmem:[%s163] sm:$0xf]
    %v165 = vld [vmem:[%s163 + $0x4] sm:$0xf]
    %v166 = vld [vmem:[%s163 + $0x8] sm:$0xf]
    %v167 = vld [vmem:[%s163 + $0xc] sm:$0xf]
    %v168 = vunpack.c.l.b16 %v64
    %v169 = vunpack.c.l.b16 %v78
    %v170 = vunpack.c.l.b16 %v92
    %v171 = vunpack.c.l.b16 %v106
    %v172 = vunpack.c.l.b16 %v120
    %v173 = vunpack.c.l.b16 %v134
    %v174 = vunpack.c.l.b16 %v148
    %v175 = vunpack.c.l.b16 %v162
    %v176 = vpack.c.b16 %v169, %v168
    %v177 = vpack.c.b16 %v171, %v170
    %v178 = vpack.c.b16 %v173, %v172
    %v179 = vpack.c.b16 %v175, %v174
    %v184 = vunpack.c.l.b16 %v164
    %v185 = vunpack.c.l.b16 %v165
    %v186 = vunpack.c.l.b16 %v166
    %v187 = vunpack.c.l.b16 %v167
    %v188 = vpack.c.b16 %v185, %v184
    %v189 = vpack.c.b16 %v187, %v186
    %vm192 = vcmask 261120
    %v194 = vsel %vm192, %v176, 0
    %v197 = vsel %vm192, %v177, 0
    %v200 = vsel %vm192, %v178, 0
    %v203 = vsel %vm192, %v179, 0
    %205 = vmatprep.subr.bf16.mxu0 0
    %206 = vmatpush1.bf16.msra.mxu0 0
    %207 = vmatprep.subr.bf16.mxu0 0
    %208 = vmatpush1.bf16.msra.mxu0 0
    %209 = vmatprep.subr.bf16.mxu0 0
    %210 = vmatpush1.bf16.msra.mxu0 0
    %211 = vmatprep.subr.bf16.mxu0 0
    %212 = vmatpush1.bf16.msra.mxu0 0
    %213 = vmatprep.subr.bf16.mxu0 0
    %214 = vmatpush1.bf16.msra.mxu0 0
    %215 = vmatprep.subr.bf16.mxu0 0
    %216 = vmatpush1.bf16.msra.mxu0 0
    %217 = vmatprep.subr.bf16.mxu0 0
    %218 = vmatpush1.bf16.msra.mxu0 %v189
    %219 = vmatprep.subr.bf16.mxu0 0
    %220 = vmatpush1.bf16.msra.mxu0 %v188
    %221 = vmatprep.subr.bf16.mxu0 0
    %222 = vmatpush2.bf16.msra.mxu0 0
    %223 = vmatprep.subr.bf16.mxu0 0
    %224 = vmatpush2.bf16.msra.mxu0 0
    %225 = vmatprep.subr.bf16.mxu0 0
    %226 = vmatpush2.bf16.msra.mxu0 0
    %227 = vmatprep.subr.bf16.mxu0 0
    %228 = vmatpush2.bf16.msra.mxu0 0
    %229 = vmatprep.subr.bf16.mxu0 0
    %230 = vmatpush2.bf16.msra.mxu0 0
    %231 = vmatprep.subr.bf16.mxu0 0
    %232 = vmatpush2.bf16.msra.mxu0 0
    %233 = vmatprep.subr.bf16.mxu0 0
    %234 = vmatpush2.bf16.msra.mxu0 0
    %235 = vmatprep.subr.bf16.mxu0 0
    %236 = vmatpush2.bf16.msra.mxu0 0
    %237 = vmatprep.mubr.bf16.mxu0 0
    %238 = vmatmul.mubr.bf16.gmra.mxu0 %v194
    %v239 = vpop.f32.mrf.mxu0
    %v240 = vadd.f32 0.0, %v239
    %v241 = vpop.f32.mrf.mxu0
    %v242 = vpop.f32.mrf.mxu0
    %v243 = vadd.f32 0.0, %v242
    %v244 = vpop.f32.mrf.mxu0
    %245 = vmatprep.mubr.bf16.mxu0 0
    %246 = vmatmul.mubr.bf16.gmra.mxu0 %v197
    %v247 = vpop.f32.mrf.mxu0
    %v248 = vadd.f32 0.0, %v247
    %v249 = vpop.f32.mrf.mxu0
    %v250 = vpop.f32.mrf.mxu0
    %v251 = vadd.f32 0.0, %v250
    %v252 = vpop.f32.mrf.mxu0
    %253 = vmatprep.mubr.bf16.mxu0 0
    %254 = vmatmul.mubr.bf16.gmra.mxu0 %v200
    %v255 = vpop.f32.mrf.mxu0
    %v256 = vadd.f32 0.0, %v255
    %v257 = vpop.f32.mrf.mxu0
    %v258 = vpop.f32.mrf.mxu0
    %v259 = vadd.f32 0.0, %v258
    %v260 = vpop.f32.mrf.mxu0
    %261 = vmatprep.mubr.bf16.mxu0 0
    %262 = vmatmul.mubr.bf16.gmra.mxu0 %v203
    %v263 = vpop.f32.mrf.mxu0
    %v264 = vadd.f32 0.0, %v263
    %v265 = vpop.f32.mrf.mxu0
    %v266 = vpop.f32.mrf.mxu0
    %v267 = vadd.f32 0.0, %v266
    %v268 = vpop.f32.mrf.mxu0
    %269 = vdwg.mxu0
    %v278 = vunpack.c.l.b16 %v28
    %v279 = vunpack.c.l.b16 %v29
    %v280 = vunpack.c.l.b16 %v30
    %v281 = vunpack.c.l.b16 %v31
    %v282 = vunpack.c.l.b16 %v32
    %v283 = vunpack.c.l.b16 %v33
    %v284 = vunpack.c.l.b16 %v34
    %v285 = vunpack.c.l.b16 %v35
    %v286 = vpack.c.b16 %v279, %v278
    %v287 = vpack.c.b16 %v281, %v280
    %v288 = vpack.c.b16 %v283, %v282
    %v289 = vpack.c.b16 %v285, %v284
    %v294 = vunpack.c.l.b16 %v36
    %v295 = vunpack.c.l.b16 %v37
    %v296 = vunpack.c.l.b16 %v38
    %v297 = vunpack.c.l.b16 %v39
    %v298 = vpack.c.b16 %v295, %v294
    %v299 = vpack.c.b16 %v297, %v296
    %v303 = vsel %vm192, %v286, 0
    %v306 = vsel %vm192, %v287, 0
    %v309 = vsel %vm192, %v288, 0
    %v312 = vsel %vm192, %v289, 0
    %314 = vmatprep.subr.bf16.mxu0 0
    %315 = vmatpush1.bf16.msra.mxu0 0
    %316 = vmatprep.subr.bf16.mxu0 0
    %317 = vmatpush1.bf16.msra.mxu0 0
    %318 = vmatprep.subr.bf16.mxu0 0
    %319 = vmatpush1.bf16.msra.mxu0 0
    %320 = vmatprep.subr.bf16.mxu0 0
    %321 = vmatpush1.bf16.msra.mxu0 0
    %322 = vmatprep.subr.bf16.mxu0 0
    %323 = vmatpush1.bf16.msra.mxu0 0
    %324 = vmatprep.subr.bf16.mxu0 0
    %325 = vmatpush1.bf16.msra.mxu0 0
    %326 = vmatprep.subr.bf16.mxu0 0
    %327 = vmatpush1.bf16.msra.mxu0 %v299
    %328 = vmatprep.subr.bf16.mxu0 0
    %329 = vmatpush1.bf16.msra.mxu0 %v298
    %330 = vmatprep.subr.bf16.mxu0 0
    %331 = vmatpush2.bf16.msra.mxu0 0
    %332 = vmatprep.subr.bf16.mxu0 0
    %333 = vmatpush2.bf16.msra.mxu0 0
    %334 = vmatprep.subr.bf16.mxu0 0
    %335 = vmatpush2.bf16.msra.mxu0 0
    %336 = vmatprep.subr.bf16.mxu0 0
    %337 = vmatpush2.bf16.msra.mxu0 0
    %338 = vmatprep.subr.bf16.mxu0 0
    %339 = vmatpush2.bf16.msra.mxu0 0
    %340 = vmatprep.subr.bf16.mxu0 0
    %341 = vmatpush2.bf16.msra.mxu0 0
    %342 = vmatprep.subr.bf16.mxu0 0
    %343 = vmatpush2.bf16.msra.mxu0 0
    %344 = vmatprep.subr.bf16.mxu0 0
    %345 = vmatpush2.bf16.msra.mxu0 0
    %346 = vmatprep.mubr.bf16.mxu0 0
    %347 = vmatmul.mubr.bf16.gmra.mxu0 %v303
    %v348 = vpop.f32.mrf.mxu0
    %v349 = vadd.f32 %v240, %v348
    %v350 = vpop.f32.mrf.mxu0
    %v351 = vpop.f32.mrf.mxu0
    %v352 = vadd.f32 %v243, %v351
    %v353 = vpop.f32.mrf.mxu0
    %354 = vmatprep.mubr.bf16.mxu0 0
    %355 = vmatmul.mubr.bf16.gmra.mxu0 %v306
    %v356 = vpop.f32.mrf.mxu0
    %v357 = vadd.f32 %v248, %v356
    %v358 = vpop.f32.mrf.mxu0
    %v359 = vpop.f32.mrf.mxu0
    %v360 = vadd.f32 %v251, %v359
    %v361 = vpop.f32.mrf.mxu0
    %362 = vmatprep.mubr.bf16.mxu0 0
    %363 = vmatmul.mubr.bf16.gmra.mxu0 %v309
    %v364 = vpop.f32.mrf.mxu0
    %v365 = vadd.f32 %v256, %v364
    %v366 = vpop.f32.mrf.mxu0
    %v367 = vpop.f32.mrf.mxu0
    %v368 = vadd.f32 %v259, %v367
    %v369 = vpop.f32.mrf.mxu0
    %370 = vmatprep.mubr.bf16.mxu0 0
    %371 = vmatmul.mubr.bf16.gmra.mxu0 %v312
    %v372 = vpop.f32.mrf.mxu0
    %v373 = vadd.f32 %v264, %v372
    %v374 = vpop.f32.mrf.mxu0
    %v375 = vpop.f32.mrf.mxu0
    %v376 = vadd.f32 %v267, %v375
    %v377 = vpop.f32.mrf.mxu0
    %378 = vdwg.mxu0
    %v379 = vld [vmem:[%s0] sm:$0xe]
    %v380 = vld [vmem:[%s0 + $0x8] sm:$0xe]
    %v381 = vld [vmem:[%s0 + $0x10] sm:$0xe]
    %v382 = vld [vmem:[%s0 + $0x18] sm:$0xe]
    %v383 = vld [vmem:[%s0 + $0x20] sm:$0xe]
    %v384 = vld [vmem:[%s0 + $0x28] sm:$0xe]
    %v385 = vld [vmem:[%s0 + $0x30] sm:$0xe]
    %v386 = vld [vmem:[%s0 + $0x38] sm:$0xe]
    %vm403 = vcmask 1042432
    %vm404 = vcmask 1046532
    %vm405 = vmor %vm403, %vm404
    %v406 = vrot.slane %v379, 5
    %v407 = vrot.slane %v406, 4
    %v408 = vrot.slane %v40, 5
    %v409 = vsel %vm405, %v407, %v408
    %v410 = vrot.slane %v380, 5
    %v411 = vrot.slane %v410, 4
    %v412 = vrot.slane %v41, 5
    %v413 = vsel %vm405, %v411, %v412
    %v414 = vrot.slane %v381, 5
    %v415 = vrot.slane %v414, 4
    %v416 = vrot.slane %v42, 5
    %v417 = vsel %vm405, %v415, %v416
    %v418 = vrot.slane %v382, 5
    %v419 = vrot.slane %v418, 4
    %v420 = vrot.slane %v43, 5
    %v421 = vsel %vm405, %v419, %v420
    %v422 = vrot.slane %v383, 5
    %v423 = vrot.slane %v422, 4
    %v424 = vrot.slane %v44, 5
    %v425 = vsel %vm405, %v423, %v424
    %v426 = vrot.slane %v384, 5
    %v427 = vrot.slane %v426, 4
    %v428 = vrot.slane %v45, 5
    %v429 = vsel %vm405, %v427, %v428
    %v430 = vrot.slane %v385, 5
    %v431 = vrot.slane %v430, 4
    %v432 = vrot.slane %v46, 5
    %v433 = vsel %vm405, %v431, %v432
    %v434 = vrot.slane %v386, 5
    %v435 = vrot.slane %v434, 4
    %v436 = vrot.slane %v47, 5
    %v437 = vsel %vm405, %v435, %v436
    %s438 = scalar_lea.vmem %s1, 32
    %v439 = vld [vmem:[%s438] sm:$0xf]
    %v440 = vld [vmem:[%s438 + $0x4] sm:$0xf]
    %v441 = vld [vmem:[%s438 + $0x8] sm:$0xf]
    %v442 = vld [vmem:[%s438 + $0xc] sm:$0xf]
    %v443 = vunpack.c.l.b16 %v409
    %v444 = vunpack.c.l.b16 %v413
    %v445 = vunpack.c.l.b16 %v417
    %v446 = vunpack.c.l.b16 %v421
    %v447 = vunpack.c.l.b16 %v425
    %v448 = vunpack.c.l.b16 %v429
    %v449 = vunpack.c.l.b16 %v433
    %v450 = vunpack.c.l.b16 %v437
    %v451 = vpack.c.b16 %v444, %v443
    %v452 = vpack.c.b16 %v446, %v445
    %v453 = vpack.c.b16 %v448, %v447
    %v454 = vpack.c.b16 %v450, %v449
    %v459 = vunpack.c.l.b16 %v439
    %v460 = vunpack.c.l.b16 %v440
    %v461 = vunpack.c.l.b16 %v441
    %v462 = vunpack.c.l.b16 %v442
    %v463 = vpack.c.b16 %v460, %v459
    %v464 = vpack.c.b16 %v462, %v461
    %v468 = vsel %vm192, %v451, 0
    %v471 = vsel %vm192, %v452, 0
    %v474 = vsel %vm192, %v453, 0
    %v477 = vsel %vm192, %v454, 0
    %479 = vmatprep.subr.bf16.mxu0 0
    %480 = vmatpush1.bf16.msra.mxu0 0
    %481 = vmatprep.subr.bf16.mxu0 0
    %482 = vmatpush1.bf16.msra.mxu0 0
    %483 = vmatprep.subr.bf16.mxu0 0
    %484 = vmatpush1.bf16.msra.mxu0 0
    %485 = vmatprep.subr.bf16.mxu0 0
    %486 = vmatpush1.bf16.msra.mxu0 0
    %487 = vmatprep.subr.bf16.mxu0 0
    %488 = vmatpush1.bf16.msra.mxu0 0
    %489 = vmatprep.subr.bf16.mxu0 0
    %490 = vmatpush1.bf16.msra.mxu0 0
    %491 = vmatprep.subr.bf16.mxu0 0
    %492 = vmatpush1.bf16.msra.mxu0 %v464
    %493 = vmatprep.subr.bf16.mxu0 0
    %494 = vmatpush1.bf16.msra.mxu0 %v463
    %495 = vmatprep.subr.bf16.mxu0 0
    %496 = vmatpush2.bf16.msra.mxu0 0
    %497 = vmatprep.subr.bf16.mxu0 0
    %498 = vmatpush2.bf16.msra.mxu0 0
    %499 = vmatprep.subr.bf16.mxu0 0
    %500 = vmatpush2.bf16.msra.mxu0 0
    %501 = vmatprep.subr.bf16.mxu0 0
    %502 = vmatpush2.bf16.msra.mxu0 0
    %503 = vmatprep.subr.bf16.mxu0 0
    %504 = vmatpush2.bf16.msra.mxu0 0
    %505 = vmatprep.subr.bf16.mxu0 0
    %506 = vmatpush2.bf16.msra.mxu0 0
    %507 = vmatprep.subr.bf16.mxu0 0
    %508 = vmatpush2.bf16.msra.mxu0 0
    %509 = vmatprep.subr.bf16.mxu0 0
    %510 = vmatpush2.bf16.msra.mxu0 0
    %511 = vmatprep.mubr.bf16.mxu0 0
    %512 = vmatmul.mubr.bf16.gmra.mxu0 %v468
    %v513 = vpop.f32.mrf.mxu0
    %v514 = vadd.f32 0.0, %v513
    %v515 = vpop.f32.mrf.mxu0
    %v516 = vpop.f32.mrf.mxu0
    %v517 = vadd.f32 0.0, %v516
    %v518 = vpop.f32.mrf.mxu0
    %519 = vmatprep.mubr.bf16.mxu0 0
    %520 = vmatmul.mubr.bf16.gmra.mxu0 %v471
    %v521 = vpop.f32.mrf.mxu0
    %v522 = vadd.f32 0.0, %v521
    %v523 = vpop.f32.mrf.mxu0
    %v524 = vpop.f32.mrf.mxu0
    %v525 = vadd.f32 0.0, %v524
    %v526 = vpop.f32.mrf.mxu0
    %527 = vmatprep.mubr.bf16.mxu0 0
    %528 = vmatmul.mubr.bf16.gmra.mxu0 %v474
    %v529 = vpop.f32.mrf.mxu0
    %v530 = vadd.f32 0.0, %v529
    %v531 = vpop.f32.mrf.mxu0
    %v532 = vpop.f32.mrf.mxu0
    %v533 = vadd.f32 0.0, %v532
    %v534 = vpop.f32.mrf.mxu0
    %535 = vmatprep.mubr.bf16.mxu0 0
    %536 = vmatmul.mubr.bf16.gmra.mxu0 %v477
    %v537 = vpop.f32.mrf.mxu0
    %v538 = vadd.f32 0.0, %v537
    %v539 = vpop.f32.mrf.mxu0
    %v540 = vpop.f32.mrf.mxu0
    %v541 = vadd.f32 0.0, %v540
    %v542 = vpop.f32.mrf.mxu0
    %543 = vdwg.mxu0
    %v544 = vadd.f32 %v349, %v514
    %v545 = vadd.f32 %v352, %v517
    %v546 = vadd.f32 %v357, %v522
    %v547 = vadd.f32 %v360, %v525
    %v548 = vadd.f32 %v365, %v530
    %v549 = vadd.f32 %v368, %v533
    %v550 = vadd.f32 %v373, %v538
    %v551 = vadd.f32 %v376, %v541
    %v552 = vld [vmem:[%s2] sm:$0xff]
    %v553 = vadd.f32 %v544, %v552
    %v554 = vadd.f32 %v545, %v552
    %v555 = vadd.f32 %v546, %v552
    %v556 = vadd.f32 %v547, %v552
    %v557 = vadd.f32 %v548, %v552
    %v558 = vadd.f32 %v549, %v552
    %v559 = vadd.f32 %v550, %v552
    %v560 = vadd.f32 %v551, %v552
    %v561 = vpack.c.bf16 %v554, %v553
    %v562 = vpack.c.bf16 %v556, %v555
    %v563 = vpack.c.bf16 %v558, %v557
    %v564 = vpack.c.bf16 %v560, %v559
    %v565 = vld [vmem:[%s3] sm:$0xf]
    %v566 = vld [vmem:[%s3 + $0x4] sm:$0xf]
    %v567 = vld [vmem:[%s3 + $0x8] sm:$0xf]
    %v568 = vld [vmem:[%s3 + $0xc] sm:$0xf]
    %v569 = vld [vmem:[%s3 + $0x10] sm:$0xf]
    %v570 = vld [vmem:[%s3 + $0x14] sm:$0xf]
    %v571 = vld [vmem:[%s3 + $0x18] sm:$0xf]
    %v572 = vld [vmem:[%s3 + $0x1c] sm:$0xf]
    %v573 = vld [vmem:[%s4] sm:$0x1]
    %v575 = vlaneseq
    %v576 = vshrl.u32 %v575, 7
    %v577 = vsub.s32 0, %v576
    %v578 = vrot.slane %v573, %v577
    %v588 = vunpack.c.l.b16 %v565
    %v589 = vunpack.c.l.b16 %v566
    %v590 = vunpack.c.l.b16 %v567
    %v591 = vunpack.c.l.b16 %v568
    %v592 = vunpack.c.l.b16 %v569
    %v593 = vunpack.c.l.b16 %v570
    %v594 = vunpack.c.l.b16 %v571
    %v595 = vunpack.c.l.b16 %v572
    %v596 = vpack.c.b16 %v589, %v588
    %v597 = vpack.c.b16 %v591, %v590
    %v598 = vpack.c.b16 %v593, %v592
    %v599 = vpack.c.b16 %v595, %v594
    %vm604 = vcmask 523264
    %v606 = vsel %vm604, %v561, 0
    %v609 = vsel %vm604, %v562, 0
    %v612 = vsel %vm604, %v563, 0
    %v615 = vsel %vm604, %v564, 0
    %617 = vmatprep.subr.bf16.mxu0 0
    %618 = vmatpush1.bf16.msra.mxu0 0
    %619 = vmatprep.subr.bf16.mxu0 0
    %620 = vmatpush1.bf16.msra.mxu0 0
    %621 = vmatprep.subr.bf16.mxu0 0
    %622 = vmatpush1.bf16.msra.mxu0 0
    %623 = vmatprep.subr.bf16.mxu0 0
    %624 = vmatpush1.bf16.msra.mxu0 0
    %625 = vmatprep.subr.bf16.mxu0 0
    %626 = vmatpush1.bf16.msra.mxu0 %v599
    %627 = vmatprep.subr.bf16.mxu0 0
    %628 = vmatpush1.bf16.msra.mxu0 %v598
    %629 = vmatprep.subr.bf16.mxu0 0
    %630 = vmatpush1.bf16.msra.mxu0 %v597
    %631 = vmatprep.subr.bf16.mxu0 0
    %632 = vmatpush1.bf16.msra.mxu0 %v596
    %633 = vmatprep.subr.bf16.mxu0 0
    %634 = vmatpush2.bf16.msra.mxu0 0
    %635 = vmatprep.subr.bf16.mxu0 0
    %636 = vmatpush2.bf16.msra.mxu0 0
    %637 = vmatprep.subr.bf16.mxu0 0
    %638 = vmatpush2.bf16.msra.mxu0 0
    %639 = vmatprep.subr.bf16.mxu0 0
    %640 = vmatpush2.bf16.msra.mxu0 0
    %641 = vmatprep.subr.bf16.mxu0 0
    %642 = vmatpush2.bf16.msra.mxu0 0
    %643 = vmatprep.subr.bf16.mxu0 0
    %644 = vmatpush2.bf16.msra.mxu0 0
    %645 = vmatprep.subr.bf16.mxu0 0
    %646 = vmatpush2.bf16.msra.mxu0 0
    %647 = vmatprep.subr.bf16.mxu0 0
    %648 = vmatpush2.bf16.msra.mxu0 0
    %649 = vmatprep.mubr.bf16.mxu0 0
    %650 = vmatmul.mubr.bf16.gmra.mxu0 %v606
    %v651 = vpop.f32.mrf.mxu0
    %v652 = vadd.f32 %v578, %v651
    %v653 = vpop.f32.mrf.mxu0
    %v654 = vpop.f32.mrf.mxu0
    %v655 = vadd.f32 %v578, %v654
    %v656 = vpop.f32.mrf.mxu0
    %657 = vmatprep.mubr.bf16.mxu0 0
    %658 = vmatmul.mubr.bf16.gmra.mxu0 %v609
    %v659 = vpop.f32.mrf.mxu0
    %v660 = vadd.f32 %v578, %v659
    %v661 = vpop.f32.mrf.mxu0
    %v662 = vpop.f32.mrf.mxu0
    %v663 = vadd.f32 %v578, %v662
    %v664 = vpop.f32.mrf.mxu0
    %665 = vmatprep.mubr.bf16.mxu0 0
    %666 = vmatmul.mubr.bf16.gmra.mxu0 %v612
    %v667 = vpop.f32.mrf.mxu0
    %v668 = vadd.f32 %v578, %v667
    %v669 = vpop.f32.mrf.mxu0
    %v670 = vpop.f32.mrf.mxu0
    %v671 = vadd.f32 %v578, %v670
    %v672 = vpop.f32.mrf.mxu0
    %673 = vmatprep.mubr.bf16.mxu0 0
    %674 = vmatmul.mubr.bf16.gmra.mxu0 %v615
    %v675 = vpop.f32.mrf.mxu0
    %v676 = vadd.f32 %v578, %v675
    %v677 = vpop.f32.mrf.mxu0
    %v678 = vpop.f32.mrf.mxu0
    %v679 = vadd.f32 %v578, %v678
    %v680 = vpop.f32.mrf.mxu0
    %681 = vdwg.mxu0
    %v682 = vtanh.pop %v652
    %v683 = vtanh.pop %v655
    %v684 = vtanh.pop %v660
    %v685 = vtanh.pop %v663
    %v686 = vtanh.pop %v668
    %v687 = vtanh.pop %v671
    %v688 = vtanh.pop %v676
    %v689 = vtanh.pop %v679
    %v690 = vld [vmem:[%s5] sm:$0x1]
    %v692 = vlaneseq
    %v693 = vshrl.u32 %v692, 7
    %v694 = vsub.s32 0, %v693
    %v695 = vrot.slane %v690, %v694
    %v697 = vmul.f32 %v682, %v695
    %v698 = vmul.f32 %v683, %v695
    %v699 = vmul.f32 %v684, %v695
    %v700 = vmul.f32 %v685, %v695
    %v701 = vmul.f32 %v686, %v695
    %v702 = vmul.f32 %v687, %v695
    %v703 = vmul.f32 %v688, %v695
    %v704 = vmul.f32 %v689, %v695
    %v705 = vsel %vm604, %v697, 0.0
    %706 = vadd.xlane.f32.xlu0 %v705
    %v707 = vpop.xlane.xlu0 %706
    %v708 = vsel %vm604, %v698, 0.0
    %709 = vadd.xlane.f32.xlu0 %v708
    %v710 = vpop.xlane.xlu0 %709
    %v711 = vsel %vm604, %v699, 0.0
    %712 = vadd.xlane.f32.xlu0 %v711
    %v713 = vpop.xlane.xlu0 %712
    %v714 = vsel %vm604, %v700, 0.0
    %715 = vadd.xlane.f32.xlu0 %v714
    %v716 = vpop.xlane.xlu0 %715
    %v717 = vsel %vm604, %v701, 0.0
    %718 = vadd.xlane.f32.xlu0 %v717
    %v719 = vpop.xlane.xlu0 %718
    %v720 = vsel %vm604, %v702, 0.0
    %721 = vadd.xlane.f32.xlu0 %v720
    %v722 = vpop.xlane.xlu0 %721
    %v723 = vsel %vm604, %v703, 0.0
    %724 = vadd.xlane.f32.xlu0 %v723
    %v725 = vpop.xlane.xlu0 %724
    %v726 = vsel %vm604, %v704, 0.0
    %727 = vadd.xlane.f32.xlu0 %v726
    %v728 = vpop.xlane.xlu0 %727
    %v737 = vlaneseq
    %v738 = vand.u32 %v737, 127
    %v739 = vlaneseq
    %v740 = vshrl.u32 %v739, 7
    %v741 = vsub.s32 %v738, %v740
    %v742 = vrot.slane %v707, %v741
    %v743 = vlaneseq
    %v744 = vshrl.u32 %v743, 7
    %v745 = vsub.s32 %v738, %v744
    %v746 = vrot.slane %v710, %v745
    %v747 = vlaneseq
    %v748 = vshrl.u32 %v747, 7
    %v749 = vsub.s32 %v738, %v748
    %v750 = vrot.slane %v713, %v749
    %v751 = vlaneseq
    %v752 = vshrl.u32 %v751, 7
    %v753 = vsub.s32 %v738, %v752
    %v754 = vrot.slane %v716, %v753
    %v755 = vlaneseq
    %v756 = vshrl.u32 %v755, 7
    %v757 = vsub.s32 %v738, %v756
    %v758 = vrot.slane %v719, %v757
    %v759 = vlaneseq
    %v760 = vshrl.u32 %v759, 7
    %v761 = vsub.s32 %v738, %v760
    %v762 = vrot.slane %v722, %v761
    %v763 = vlaneseq
    %v764 = vshrl.u32 %v763, 7
    %v765 = vsub.s32 %v738, %v764
    %v766 = vrot.slane %v725, %v765
    %v767 = vlaneseq
    %v768 = vshrl.u32 %v767, 7
    %v769 = vsub.s32 %v738, %v768
    %v770 = vrot.slane %v728, %v769
    %vm771 = vcmask 1041409
    %v772 = vsel %vm771, %v746, %v742
    %vm773 = vcmask 1042434
    %v774 = vsel %vm773, %v750, %v772
    %vm775 = vcmask 1043459
    %v776 = vsel %vm775, %v754, %v774
    %vm777 = vcmask 1044484
    %v778 = vsel %vm777, %v758, %v776
    %vm779 = vcmask 1045509
    %v780 = vsel %vm779, %v762, %v778
    %vm781 = vcmask 1046534
    %v782 = vsel %vm781, %v766, %v780
    %vm783 = vcmask 1047559
    %v784 = vsel %vm783, %v770, %v782
    %vm786 = vcmask 64512
    %v787 = vsel %vm786, %v784, -inf
    %788 = vmax.xlane.f32.xlu0 %v787
    %v789 = vpop.xlane.xlu0 %788
    %v791 = vlaneseq
    %v792 = vshrl.u32 %v791, 7
    %v793 = vsub.s32 0, %v792
    %v794 = vrot.slane %v789, %v793
    %v795 = vlaneseq
    %v796 = vshrl.u32 %v795, 7
    %v797 = vsub.s32 1, %v796
    %v798 = vrot.slane %v789, %v797
    %v799 = vlaneseq
    %v800 = vshrl.u32 %v799, 7
    %v801 = vsub.s32 2, %v800
    %v802 = vrot.slane %v789, %v801
    %v803 = vlaneseq
    %v804 = vshrl.u32 %v803, 7
    %v805 = vsub.s32 3, %v804
    %v806 = vrot.slane %v789, %v805
    %v807 = vlaneseq
    %v808 = vshrl.u32 %v807, 7
    %v809 = vsub.s32 4, %v808
    %v810 = vrot.slane %v789, %v809
    %v811 = vlaneseq
    %v812 = vshrl.u32 %v811, 7
    %v813 = vsub.s32 5, %v812
    %v814 = vrot.slane %v789, %v813
    %v815 = vlaneseq
    %v816 = vshrl.u32 %v815, 7
    %v817 = vsub.s32 6, %v816
    %v818 = vrot.slane %v789, %v817
    %v819 = vlaneseq
    %v820 = vshrl.u32 %v819, 7
    %v821 = vsub.s32 7, %v820
    %v822 = vrot.slane %v789, %v821
    %v831 = vsub.f32 %v707, %v794
    %v832 = vsub.f32 %v710, %v798
    %v833 = vsub.f32 %v713, %v802
    %v834 = vsub.f32 %v716, %v806
    %v835 = vsub.f32 %v719, %v810
    %v836 = vsub.f32 %v722, %v814
    %v837 = vsub.f32 %v725, %v818
    %v838 = vsub.f32 %v728, %v822
    %v839 = vmul.f32 %v831, 1.442695
    %v840 = vpow.pop %v839
    %v841 = vmul.f32 %v832, 1.442695
    %v842 = vpow.pop %v841
    %v843 = vmul.f32 %v833, 1.442695
    %v844 = vpow.pop %v843
    %v845 = vmul.f32 %v834, 1.442695
    %v846 = vpow.pop %v845
    %v847 = vmul.f32 %v835, 1.442695
    %v848 = vpow.pop %v847
    %v849 = vmul.f32 %v836, 1.442695
    %v850 = vpow.pop %v849
    %v851 = vmul.f32 %v837, 1.442695
    %v852 = vpow.pop %v851
    %v853 = vmul.f32 %v838, 1.442695
    %v854 = vpow.pop %v853
    %863 = vset.pattern.permute.xlu0 0
    %864 = vperm.xlu0 %863, %v840
    %v865 = vpop.permute.xlu0 %864
    %866 = vset.pattern.permute.xlu0 0
    %867 = vperm.xlu0 %866, %v842
    %v868 = vpop.permute.xlu0 %867
    %869 = vset.pattern.permute.xlu0 0
    %870 = vperm.xlu0 %869, %v844
    %v871 = vpop.permute.xlu0 %870
    %872 = vset.pattern.permute.xlu0 0
    %873 = vperm.xlu0 %872, %v846
    %v874 = vpop.permute.xlu0 %873
    %875 = vset.pattern.permute.xlu0 0
    %876 = vperm.xlu0 %875, %v848
    %v877 = vpop.permute.xlu0 %876
    %878 = vset.pattern.permute.xlu0 0
    %879 = vperm.xlu0 %878, %v850
    %v880 = vpop.permute.xlu0 %879
    %881 = vset.pattern.permute.xlu0 0
    %882 = vperm.xlu0 %881, %v852
    %v883 = vpop.permute.xlu0 %882
    %884 = vset.pattern.permute.xlu0 0
    %885 = vperm.xlu0 %884, %v854
    %v886 = vpop.permute.xlu0 %885
    %v887 = vlaneseq
    %v888 = vshrl.u32 %v887, 7
    %v889 = vsub.s32 %v738, %v888
    %v890 = vrot.slane %v865, %v889
    %v891 = vlaneseq
    %v892 = vshrl.u32 %v891, 7
    %v893 = vsub.s32 %v738, %v892
    %v894 = vrot.slane %v868, %v893
    %v895 = vlaneseq
    %v896 = vshrl.u32 %v895, 7
    %v897 = vsub.s32 %v738, %v896
    %v898 = vrot.slane %v871, %v897
    %v899 = vlaneseq
    %v900 = vshrl.u32 %v899, 7
    %v901 = vsub.s32 %v738, %v900
    %v902 = vrot.slane %v874, %v901
    %v903 = vlaneseq
    %v904 = vshrl.u32 %v903, 7
    %v905 = vsub.s32 %v738, %v904
    %v906 = vrot.slane %v877, %v905
    %v907 = vlaneseq
    %v908 = vshrl.u32 %v907, 7
    %v909 = vsub.s32 %v738, %v908
    %v910 = vrot.slane %v880, %v909
    %v911 = vlaneseq
    %v912 = vshrl.u32 %v911, 7
    %v913 = vsub.s32 %v738, %v912
    %v914 = vrot.slane %v883, %v913
    %v915 = vlaneseq
    %v916 = vshrl.u32 %v915, 7
    %v917 = vsub.s32 %v738, %v916
    %v918 = vrot.slane %v886, %v917
    %v919 = vsel %vm771, %v894, %v890
    %v920 = vsel %vm773, %v898, %v919
    %v921 = vsel %vm775, %v902, %v920
    %v922 = vsel %vm777, %v906, %v921
    %v923 = vsel %vm779, %v910, %v922
    %v924 = vsel %vm781, %v914, %v923
    %v925 = vsel %vm783, %v918, %v924
    %v927 = vsel %vm786, %v925, 0.0
    %928 = vadd.xlane.f32.xlu0 %v927
    %v929 = vpop.xlane.xlu0 %928
    %v930 = vrcp.pop %v929
    %v932 = vlaneseq
    %v933 = vshrl.u32 %v932, 7
    %v934 = vsub.s32 0, %v933
    %v935 = vrot.slane %v930, %v934
    %v936 = vlaneseq
    %v937 = vshrl.u32 %v936, 7
    %v938 = vsub.s32 1, %v937
    %v939 = vrot.slane %v930, %v938
    %v940 = vlaneseq
    %v941 = vshrl.u32 %v940, 7
    %v942 = vsub.s32 2, %v941
    %v943 = vrot.slane %v930, %v942
    %v944 = vlaneseq
    %v945 = vshrl.u32 %v944, 7
    %v946 = vsub.s32 3, %v945
    %v947 = vrot.slane %v930, %v946
    %v948 = vlaneseq
    %v949 = vshrl.u32 %v948, 7
    %v950 = vsub.s32 4, %v949
    %v951 = vrot.slane %v930, %v950
    %v952 = vlaneseq
    %v953 = vshrl.u32 %v952, 7
    %v954 = vsub.s32 5, %v953
    %v955 = vrot.slane %v930, %v954
    %v956 = vlaneseq
    %v957 = vshrl.u32 %v956, 7
    %v958 = vsub.s32 6, %v957
    %v959 = vrot.slane %v930, %v958
    %v960 = vlaneseq
    %v961 = vshrl.u32 %v960, 7
    %v962 = vsub.s32 7, %v961
    %v963 = vrot.slane %v930, %v962
    %v972 = vmul.f32 %v840, %v935
    %v973 = vmul.f32 %v842, %v939
    %v974 = vmul.f32 %v844, %v943
    %v975 = vmul.f32 %v846, %v947
    %v976 = vmul.f32 %v848, %v951
    %v977 = vmul.f32 %v850, %v955
    %v978 = vmul.f32 %v852, %v959
    %v979 = vmul.f32 %v854, %v963
    %981 = vset.pattern.permute.xlu0 0
    %982 = vperm.xlu0 %981, %v972
    %v983 = vpop.permute.xlu0 %982
    %986 = vset.pattern.permute.xlu0 0
    %987 = vperm.xlu0 %986, %v973
    %v988 = vpop.permute.xlu0 %987
    %991 = vset.pattern.permute.xlu0 0
    %992 = vperm.xlu0 %991, %v974
    %v993 = vpop.permute.xlu0 %992
    %996 = vset.pattern.permute.xlu0 0
    %997 = vperm.xlu0 %996, %v975
    %v998 = vpop.permute.xlu0 %997
    %1001 = vset.pattern.permute.xlu0 0
    %1002 = vperm.xlu0 %1001, %v976
    %v1003 = vpop.permute.xlu0 %1002
    %1006 = vset.pattern.permute.xlu0 0
    %1007 = vperm.xlu0 %1006, %v977
    %v1008 = vpop.permute.xlu0 %1007
    %1011 = vset.pattern.permute.xlu0 0
    %1012 = vperm.xlu0 %1011, %v978
    %v1013 = vpop.permute.xlu0 %1012
    %1016 = vset.pattern.permute.xlu0 0
    %1017 = vperm.xlu0 %1016, %v979
    %v1018 = vpop.permute.xlu0 %1017
    %v1020 = vmul.f32 %v553, %v983
    %v1021 = vmul.f32 %v554, %v988
    %v1022 = vmul.f32 %v555, %v993
    %v1023 = vmul.f32 %v556, %v998
    %v1024 = vmul.f32 %v557, %v1003
    %v1025 = vmul.f32 %v558, %v1008
    %v1026 = vmul.f32 %v559, %v1013
    %v1027 = vmul.f32 %v560, %v1018
    %v1028 = vsel %vm604, %v1020, 0.0
    %v1029 = vrot.slane %v1028, 4
    %v1030 = vadd.f32 %v1028, %v1029
    %v1031 = vrot.slane %v1030, 2
    %v1032 = vadd.f32 %v1030, %v1031
    %v1033 = vrot.slane %v1032, 1
    %v1034 = vadd.f32 %v1032, %v1033
    %v1035 = vsel %vm604, %v1021, 0.0
    %v1036 = vrot.slane %v1035, 4
    %v1037 = vadd.f32 %v1035, %v1036
    %v1038 = vrot.slane %v1037, 2
    %v1039 = vadd.f32 %v1037, %v1038
    %v1040 = vrot.slane %v1039, 1
    %v1041 = vadd.f32 %v1039, %v1040
    %v1042 = vsel %vm604, %v1022, 0.0
    %v1043 = vrot.slane %v1042, 4
    %v1044 = vadd.f32 %v1042, %v1043
    %v1045 = vrot.slane %v1044, 2
    %v1046 = vadd.f32 %v1044, %v1045
    %v1047 = vrot.slane %v1046, 1
    %v1048 = vadd.f32 %v1046, %v1047
    %v1049 = vsel %vm604, %v1023, 0.0
    %v1050 = vrot.slane %v1049, 4
    %v1051 = vadd.f32 %v1049, %v1050
    %v1052 = vrot.slane %v1051, 2
    %v1053 = vadd.f32 %v1051, %v1052
    %v1054 = vrot.slane %v1053, 1
    %v1055 = vadd.f32 %v1053, %v1054
    %v1056 = vsel %vm604, %v1024, 0.0
    %v1057 = vrot.slane %v1056, 4
    %v1058 = vadd.f32 %v1056, %v1057
    %v1059 = vrot.slane %v1058, 2
    %v1060 = vadd.f32 %v1058, %v1059
    %v1061 = vrot.slane %v1060, 1
    %v1062 = vadd.f32 %v1060, %v1061
    %v1063 = vsel %vm604, %v1025, 0.0
    %v1064 = vrot.slane %v1063, 4
    %v1065 = vadd.f32 %v1063, %v1064
    %v1066 = vrot.slane %v1065, 2
    %v1067 = vadd.f32 %v1065, %v1066
    %v1068 = vrot.slane %v1067, 1
    %v1069 = vadd.f32 %v1067, %v1068
    %v1070 = vsel %vm604, %v1026, 0.0
    %v1071 = vrot.slane %v1070, 4
    %v1072 = vadd.f32 %v1070, %v1071
    %v1073 = vrot.slane %v1072, 2
    %v1074 = vadd.f32 %v1072, %v1073
    %v1075 = vrot.slane %v1074, 1
    %v1076 = vadd.f32 %v1074, %v1075
    %v1077 = vsel %vm604, %v1027, 0.0
    %v1078 = vrot.slane %v1077, 4
    %v1079 = vadd.f32 %v1077, %v1078
    %v1080 = vrot.slane %v1079, 2
    %v1081 = vadd.f32 %v1079, %v1080
    %v1082 = vrot.slane %v1081, 1
    %v1083 = vadd.f32 %v1081, %v1082
    %v1084 = vpack.c.bf16 %v1034, %v1034
    %v1085 = vpack.c.bf16 %v1041, %v1041
    %v1086 = vpack.c.bf16 %v1048, %v1048
    %v1087 = vpack.c.bf16 %v1055, %v1055
    %v1088 = vpack.c.bf16 %v1062, %v1062
    %v1089 = vpack.c.bf16 %v1069, %v1069
    %v1090 = vpack.c.bf16 %v1076, %v1076
    %v1091 = vpack.c.bf16 %v1083, %v1083
    %v1092 = vld [vmem:[%s6] sm:$0xf]
    %v1093 = vld [vmem:[%s6 + $0x4] sm:$0xf]
    %v1094 = vld [vmem:[%s6 + $0x8] sm:$0xf]
    %v1095 = vld [vmem:[%s6 + $0xc] sm:$0xf]
    %v1096 = vld [vmem:[%s6 + $0x10] sm:$0xf]
    %v1097 = vld [vmem:[%s6 + $0x14] sm:$0xf]
    %v1098 = vld [vmem:[%s6 + $0x18] sm:$0xf]
    %v1099 = vld [vmem:[%s6 + $0x1c] sm:$0xf]
    %v1108 = vunpack.c.l.b16 %v1084
    %v1109 = vunpack.c.l.b16 %v1085
    %v1110 = vunpack.c.l.b16 %v1086
    %v1111 = vunpack.c.l.b16 %v1087
    %v1112 = vunpack.c.l.b16 %v1088
    %v1113 = vunpack.c.l.b16 %v1089
    %v1114 = vunpack.c.l.b16 %v1090
    %v1115 = vunpack.c.l.b16 %v1091
    %v1116 = vsel %vm771, %v1109, %v1108
    %v1117 = vsel %vm773, %v1110, %v1116
    %v1118 = vsel %vm775, %v1111, %v1117
    %v1119 = vsel %vm777, %v1112, %v1118
    %v1120 = vsel %vm779, %v1113, %v1119
    %v1121 = vsel %vm781, %v1114, %v1120
    %v1122 = vsel %vm783, %v1115, %v1121
    %v1123 = vpack.c.b16 %v1122, %v1122
    %v1132 = vunpack.c.l.b16 %v1092
    %v1133 = vunpack.c.l.b16 %v1093
    %v1134 = vunpack.c.l.b16 %v1094
    %v1135 = vunpack.c.l.b16 %v1095
    %v1136 = vunpack.c.l.b16 %v1096
    %v1137 = vunpack.c.l.b16 %v1097
    %v1138 = vunpack.c.l.b16 %v1098
    %v1139 = vunpack.c.l.b16 %v1099
    %v1140 = vpack.c.b16 %v1133, %v1132
    %v1141 = vpack.c.b16 %v1135, %v1134
    %v1142 = vpack.c.b16 %v1137, %v1136
    %v1143 = vpack.c.b16 %v1139, %v1138
    %v1149 = vsel %vm604, %v1123, 0
    %1151 = vmatprep.subr.bf16.mxu0 0
    %1152 = vmatpush1.bf16.msra.mxu0 0
    %1153 = vmatprep.subr.bf16.mxu0 0
    %1154 = vmatpush1.bf16.msra.mxu0 0
    %1155 = vmatprep.subr.bf16.mxu0 0
    %1156 = vmatpush1.bf16.msra.mxu0 0
    %1157 = vmatprep.subr.bf16.mxu0 0
    %1158 = vmatpush1.bf16.msra.mxu0 0
    %1159 = vmatprep.subr.bf16.mxu0 0
    %1160 = vmatpush1.bf16.msra.mxu0 %v1143
    %1161 = vmatprep.subr.bf16.mxu0 0
    %1162 = vmatpush1.bf16.msra.mxu0 %v1142
    %1163 = vmatprep.subr.bf16.mxu0 0
    %1164 = vmatpush1.bf16.msra.mxu0 %v1141
    %1165 = vmatprep.subr.bf16.mxu0 0
    %1166 = vmatpush1.bf16.msra.mxu0 %v1140
    %1167 = vmatprep.subr.bf16.mxu0 0
    %1168 = vmatpush2.bf16.msra.mxu0 0
    %1169 = vmatprep.subr.bf16.mxu0 0
    %1170 = vmatpush2.bf16.msra.mxu0 0
    %1171 = vmatprep.subr.bf16.mxu0 0
    %1172 = vmatpush2.bf16.msra.mxu0 0
    %1173 = vmatprep.subr.bf16.mxu0 0
    %1174 = vmatpush2.bf16.msra.mxu0 0
    %1175 = vmatprep.subr.bf16.mxu0 0
    %1176 = vmatpush2.bf16.msra.mxu0 0
    %1177 = vmatprep.subr.bf16.mxu0 0
    %1178 = vmatpush2.bf16.msra.mxu0 0
    %1179 = vmatprep.subr.bf16.mxu0 0
    %1180 = vmatpush2.bf16.msra.mxu0 0
    %1181 = vmatprep.subr.bf16.mxu0 0
    %1182 = vmatpush2.bf16.msra.mxu0 0
    %1183 = vmatprep.mubr.bf16.mxu0 0
    %1184 = vmatmul.mubr.bf16.gmra.mxu0 %v1149
    %v1185 = vpop.f32.mrf.mxu0
    %v1186 = vadd.f32 0.0, %v1185
    %v1187 = vpop.f32.mrf.mxu0
    %v1188 = vpop.f32.mrf.mxu0
    %v1189 = vpop.f32.mrf.mxu0
    %1190 = vdwg.mxu0
    %v1191 = vpack.c.bf16 %v1186, %v1186
    %vm1192 = vcmask 257024
    %1193 = vst.msk [vmem:[#allocation2] sm:$0xf] %vm1192, %v1191
    // Predicated region
    $region30: #{tpu_custom_call.1} parent=1 // pred_check
      _
    $region31: #{tpu_custom_call.1} parent=1 // pred_check_branch
      %1195 = sbr.rel (0) target = $region33
    $region32: #{tpu_custom_call.1} parent=1 // pred_region
      %s1197 = ssub.s32 64, 64
      %1198 = vsyncadd [#allocation3], %s1197
      %s1200 = sshll.u32 [#allocation2], 4
      %s1201 = int_to_ptr.vmem [resolvable:$true] %s1200
      %1203 = dma.vmem_to_hbm [thread:$0]  %s1201, 64, %s7, [#allocation3]
    $region33: #{tpu_custom_call.1} parent=1 // pred_fallthru
      _
    // Predicated region
    $region34: #{tpu_custom_call.1} parent=1 // pred_check
      _
    $region35: #{tpu_custom_call.1} parent=1 // pred_check_branch
      %1205 = sbr.rel (0) target = $region37
    $region36: #{tpu_custom_call.1} parent=1 // pred_region
      %1206 = dma.done [#allocation3], 64
    $region37: #{tpu_custom_call.1} parent=1 // pred_fallthru
      _
    %1207 = vsyncpa [#allocation3], 1

</llo_original>
